<compile_context>
chip_gen: v6e
topology: v6e:2x2x1
jax: 0.10.0
libtpu: 0.0.40
codegen_flags: <defaults>
</compile_context>

<pallas_src>
import math

import jax
import jax.numpy as jnp
from jax.experimental import pallas as pl
from jax.experimental.pallas import tpu as pltpu

LANE = 128
SUBLANE = 8
MIN_PALLAS_ELEMENTS = 1024     # below this a pallas_call launch dominates


def _round_up(x: int, m: int) -> int:
    return ((x + m - 1) // m) * m


def _cdiv(a: int, b: int) -> int:
    return -(-a // b)


def _hw_params():
    """(target bytes per input block, vmem_limit_bytes) for this TPU gen."""
    kind = ""
    try:
        kind = jax.devices()[0].device_kind.lower()
    except Exception:
        pass
    if "7" in kind:                               # v7x: ~3.2 TB/s HBM, 64 MiB VMEM
        return 4 * 1024 * 1024, 48 * 1024 * 1024
    return 2 * 1024 * 1024, 32 * 1024 * 1024      # v5e / v6e / unknown


# ----------------------------------------------------------------------------
# Kernels
# ----------------------------------------------------------------------------
def _partial_sum_kernel(pred_ref, true_ref, logvar_ref, partial_ref):
    """Per-tile partial sum of (2 * loss), reduced to one native (8,128) tile."""
    p = pred_ref[...].astype(jnp.float32)
    t = true_ref[...].astype(jnp.float32)
    lv = logvar_ref[...].astype(jnp.float32)
    d = p - t
    loss2 = jnp.exp(-lv) * (d * d) + lv          # 2*loss; 0.5 hoisted to wrapper
    partial_ref[...] = jnp.sum(loss2.reshape(-1, SUBLANE, LANE), axis=0)


def _elementwise_kernel(pred_ref, true_ref, logvar_ref, out_ref):
    """Elementwise uncertainty loss (reduction='none')."""
    p = pred_ref[...].astype(jnp.float32)
    t = true_ref[...].astype(jnp.float32)
    lv = logvar_ref[...].astype(jnp.float32)
    d = p - t
    out_ref[...] = (0.5 * (jnp.exp(-lv) * (d * d) + lv)).astype(out_ref.dtype)


# ----------------------------------------------------------------------------
# Wrapper
# ----------------------------------------------------------------------------
def _as_slab(x: jax.Array, rows_padded: int) -> jax.Array:
    flat = x.reshape(-1)
    total = rows_padded * LANE
    if flat.shape[0] != total:     # only unaligned sizes pay a pad-copy
        flat = jnp.pad(flat, (0, total - flat.shape[0]))
    return flat.reshape(rows_padded, LANE)


def _uncertainty_loss_jax(pred, true, lv, reduction):
    loss = 0.5 * (jnp.exp(-lv) * (pred - true) ** 2 + lv)
    if reduction == "mean":
        return loss.mean()
    if reduction == "sum":
        return loss.sum()
    return loss


def uncertainty_loss(pred_days: jax.Array,
                     true_days: jax.Array,
                     log_variance: jax.Array,
                     reduction: str = "mean") -> jax.Array:
    """Pallas implementation of UncertaintyLoss.forward for arbitrary shapes."""
    assert pred_days.shape == true_days.shape == log_variance.shape
    if reduction not in ("mean", "sum", "none"):
        raise ValueError(f"unknown reduction: {reduction}")

    orig_shape = pred_days.shape
    n = int(math.prod(orig_shape)) if orig_shape else 1

    # Tiny / empty inputs: pure-JAX fallback (also preserves torch's
    # mean-of-empty -> nan semantics).
    if n < MIN_PALLAS_ELEMENTS:
        return _uncertainty_loss_jax(pred_days, true_days, log_variance,
                                     reduction)

    result_dtype = jnp.result_type(pred_days.dtype, true_days.dtype,
                                   log_variance.dtype)
    itemsize = max(jnp.dtype(a.dtype).itemsize
                   for a in (pred_days, true_days, log_variance))

    # Balanced, byte- and generation-aware tiling.
    target_block_bytes, vmem_limit = _hw_params()
    target_rows = max(SUBLANE,
                      (target_block_bytes // (LANE * itemsize))
                      // SUBLANE * SUBLANE)
    rows = _cdiv(n, LANE)
    num_tiles = _cdiv(rows, target_rows)
    if rows >= 2 * SUBLANE:
        num_tiles = max(num_tiles, 2)       # keep both v7x TensorCores busy
    if num_tiles > 1 and num_tiles % 2:
        num_tiles += 1                      # even split across 2 TCs
    tile_m = _round_up(_cdiv(rows, num_tiles), SUBLANE)
    rows_padded = num_tiles * tile_m        # padding waste < 8 rows per tile
    grid = (num_tiles,)

    p2 = _as_slab(pred_days, rows_padded)
    t2 = _as_slab(true_days, rows_padded)
    lv2 = _as_slab(log_variance, rows_padded)

    in_spec = pl.BlockSpec((tile_m, LANE), lambda i: (i, 0))
    cparams = pltpu.CompilerParams(
        dimension_semantics=("parallel",),
        vmem_limit_bytes=vmem_limit,
    )
    in_bytes = 3 * rows_padded * LANE * itemsize

    if reduction in ("mean", "sum"):
        partials = pl.pallas_call(
            _partial_sum_kernel,
            out_shape=jax.ShapeDtypeStruct((num_tiles * SUBLANE, LANE),
                                           jnp.float32),
            grid_spec=pltpu.PrefetchScalarGridSpec(
                num_scalar_prefetch=0,
                grid=grid,
                in_specs=[in_spec, in_spec, in_spec],
                out_specs=pl.BlockSpec((SUBLANE, LANE), lambda i: (i, 0)),
            ),
            compiler_params=cparams,
            cost_estimate=pl.CostEstimate(
                flops=5 * rows_padded * LANE,
                transcendentals=rows_padded * LANE,
                bytes_accessed=in_bytes + num_tiles * SUBLANE * LANE * 4,
            ),
        )(p2, t2, lv2)
        total = 0.5 * jnp.sum(partials)     # tiny final reduce + hoisted 0.5
        if reduction == "mean":
            total = total / jnp.float32(n)
        return total.astype(result_dtype)

    # reduction == "none"
    out2 = pl.pallas_call(
        _elementwise_kernel,
        out_shape=jax.ShapeDtypeStruct((rows_padded, LANE), result_dtype),
        grid_spec=pltpu.PrefetchScalarGridSpec(
            num_scalar_prefetch=0,
            grid=grid,
            in_specs=[in_spec, in_spec, in_spec],
            out_specs=pl.BlockSpec((tile_m, LANE), lambda i: (i, 0)),
        ),
        compiler_params=cparams,
        cost_estimate=pl.CostEstimate(
            flops=6 * rows_padded * LANE,
            transcendentals=rows_padded * LANE,
            bytes_accessed=in_bytes
            + rows_padded * LANE * jnp.dtype(result_dtype).itemsize,
        ),
    )(p2, t2, lv2)
    if n == rows_padded * LANE:             # aligned: pure (free) reshape
        return out2.reshape(orig_shape)
    return out2.reshape(-1)[:n].reshape(orig_shape)


# ----------------------------------------------------------------------------
# Reference (pure JAX) for validation
# ----------------------------------------------------------------------------
def uncertainty_loss_ref(pred, true, log_var, reduction="mean"):
    precision = jnp.exp(-log_var)
    sq_error = (pred - true) ** 2
    loss = 0.5 * (precision * sq_error + log_var)
    if reduction == "mean":
        return loss.mean()
    elif reduction == "sum":
        return loss.sum()
    return loss


if __name__ == "__main__":
    key = jax.random.PRNGKey(0)
    shapes = [
        (2, 7, 19),     # tiny            -> pure-JAX fallback path
        (8, 16, 33),    # n=4224 ragged   -> minimal pad + 2-tile kernel
        (4, 8, 128),    # n=4096 aligned  -> copy-free 2-tile kernel
    ]
    ok = True
    for si, shape in enumerate(shapes):
        k1, k2, k3 = jax.random.split(jax.random.fold_in(key, si), 3)
        pred_days = jax.random.normal(k1, shape, dtype=jnp.float32) * 3.0
        true_days = jax.random.normal(k2, shape, dtype=jnp.float32) * 3.0
        log_variance = jax.random.normal(k3, shape, dtype=jnp.float32) * 0.5
        for reduction in ("mean", "sum", "none"):
            out = jax.block_until_ready(
                uncertainty_loss(pred_days, true_days, log_variance,
                                 reduction))
            ref = uncertainty_loss_ref(pred_days, true_days, log_variance,
                                       reduction)
            if not jnp.allclose(out, ref, rtol=1e-5, atol=1e-3):
                ok = False
                print(f"MISMATCH shape={shape} reduction={reduction}")
    if ok:
        print("KERNEL_OK")
</pallas_src>

<mosaic_0001>
module attributes {stable_mosaic.version = 11 : i64} {
  func.func @_partial_sum_kernel(%arg0: i32, %arg1: memref<24x128xf32, #tpu.memory_space<vmem>>, %arg2: memref<24x128xf32, #tpu.memory_space<vmem>>, %arg3: memref<24x128xf32, #tpu.memory_space<vmem>>, %arg4: memref<8x128xf32, #tpu.memory_space<vmem>>) attributes {dimension_semantics = [#tpu.dimension_semantics<parallel>], iteration_bounds = array<i64: 2>, scalar_prefetch = 0 : i64, scratch_operands = 0 : i64, tpu.core_type = #tpu.core_type<tc>, window_params = [{transform_indices = @transform_0, window_bounds = array<i64: 24, 128>}, {transform_indices = @transform_1, window_bounds = array<i64: 24, 128>}, {transform_indices = @transform_2, window_bounds = array<i64: 24, 128>}, {transform_indices = @transform_3, window_bounds = array<i64: 8, 128>}]} {
    %c0 = arith.constant 0 : index
    %c0_0 = arith.constant 0 : index
    %0 = vector.load %arg1[%c0, %c0_0] : memref<24x128xf32, #tpu.memory_space<vmem>>, vector<24x128xf32>
    %c0_1 = arith.constant 0 : index
    %c0_2 = arith.constant 0 : index
    %1 = vector.load %arg2[%c0_1, %c0_2] : memref<24x128xf32, #tpu.memory_space<vmem>>, vector<24x128xf32>
    %c0_3 = arith.constant 0 : index
    %c0_4 = arith.constant 0 : index
    %2 = vector.load %arg3[%c0_3, %c0_4] : memref<24x128xf32, #tpu.memory_space<vmem>>, vector<24x128xf32>
    %3 = arith.subf %0, %1 : vector<24x128xf32>
    %cst = arith.constant 0.000000e+00 : f32
    %4 = vector.broadcast %cst : f32 to vector<24x128xf32>
    %5 = arith.subf %4, %2 : vector<24x128xf32>
    %6 = math.exp %5 : vector<24x128xf32>
    %7 = arith.mulf %3, %3 : vector<24x128xf32>
    %8 = arith.mulf %6, %7 : vector<24x128xf32>
    %9 = arith.addf %8, %2 : vector<24x128xf32>
    %10 = vector.shape_cast %9 : vector<24x128xf32> to vector<3x8x128xf32>
    %cst_5 = arith.constant dense<0.000000e+00> : vector<8x128xf32>
    %11 = vector.multi_reduction <add>, %10, %cst_5 [0] : vector<3x8x128xf32> to vector<8x128xf32>
    %c0_6 = arith.constant 0 : index
    %c0_7 = arith.constant 0 : index
    %12 = vector.load %arg4[%c0_6, %c0_7] : memref<8x128xf32, #tpu.memory_space<vmem>>, vector<8x128xf32>
    tpu.vector_store %arg4[%c0_6, %c0_7], %11 {strides = array<i32>} : memref<8x128xf32, #tpu.memory_space<vmem>>, vector<8x128xf32>,
    return
  }
  func.func @transform_0(%arg0: i32) -> (i32, i32) {
    %c0_i32 = arith.constant 0 : i32
    %c0_i32_0 = arith.constant 0 : i32
    return %arg0, %c0_i32 : i32, i32
  }
  func.func @transform_1(%arg0: i32) -> (i32, i32) {
    %c0_i32 = arith.constant 0 : i32
    %c0_i32_0 = arith.constant 0 : i32
    return %arg0, %c0_i32 : i32, i32
  }
  func.func @transform_2(%arg0: i32) -> (i32, i32) {
    %c0_i32 = arith.constant 0 : i32
    %c0_i32_0 = arith.constant 0 : i32
    return %arg0, %c0_i32 : i32, i32
  }
  func.func @transform_3(%arg0: i32) -> (i32, i32) {
    %c0_i32 = arith.constant 0 : i32
    %c0_i32_0 = arith.constant 0 : i32
    return %arg0, %c0_i32 : i32, i32
  }
}

</mosaic_0001>

<llo_original>
// kernel: tpu_custom_call.1
$region0: #{tpu_custom_call.1}
  #allocation0 [shape = 'u32[]', space=smem, size = 0x4, offset = 0x4, fixed_abs, tag = 'smem constant byte address 0x4 - core index']
  #allocation1 [shape = 'u32[144,128]{1,0:T(1,128)}', space=vmem, size = 0x12000, scoped, tag = 'internal scratch']
  %s0 = inlined_call_operand.hbm [shape: f32[48,128], index: 0, kind: input, shape index: {}]
  %s1 = inlined_call_operand.hbm [shape: f32[48,128], index: 1, kind: input, shape index: {}]
  %s2 = inlined_call_operand.hbm [shape: f32[48,128], index: 2, kind: input, shape index: {}]
  %s3 = inlined_call_operand.hbm [shape: f32[16,128], index: 3, kind: output, shape index: {}]
  %s4 = sld [smem:[#allocation0]]
  $region57: #{tpu_custom_call.1} parent=0
    _
  %s6 = ssub.s32 1, %s4
  %s7 = scalar_select 0, %s6, %s4
  $region1: #{tpu_custom_call.1} parent=0
    #allocation2 [shape = 'u8[24576]{0}', space=vmem, size = 0x6000, scoped, tag = 'input window, operand 0']
    #allocation3 [shape = 's32[2]{0}', space=sflag, size = 0x8, scoped, tag = 'scoped memory for tpu_custom_call.1']
    #allocation4 [shape = 's32[2]{0}', space=sflag, size = 0x8, scoped, tag = 'scoped memory for tpu_custom_call.1']
    #allocation5 [shape = 'u8[24576]{0}', space=vmem, size = 0x6000, scoped, tag = 'input window, operand 1']
    #allocation6 [shape = 's32[2]{0}', space=sflag, size = 0x8, scoped, tag = 'scoped memory for tpu_custom_call.1']
    #allocation7 [shape = 'u8[24576]{0}', space=vmem, size = 0x6000, scoped, tag = 'input window, operand 2']
    #allocation8 [shape = 'u8[8192]{0}', space=vmem, size = 0x2000, scoped, tag = 'output window, operand 0']
    %8 = vsyncpa [#allocation3], 0
    %s9 = scalar_lea.sflag [#allocation3], 1
    %10 = vsyncpa %s9, 0
    %11 = vsyncpa [#allocation6], 0
    %s12 = scalar_lea.sflag [#allocation6], 1
    %13 = vsyncpa %s12, 0
    %14 = vsyncpa [#allocation4], 0
    %s15 = scalar_lea.sflag [#allocation4], 1
    %16 = vsyncpa %s15, 0
    loop: start=0, step=1, limit=4
    $region2: #{tpu_custom_call.1} parent=1 // loop_pre_header
      _
    $region3: #{tpu_custom_call.1} parent=1 // loop_header
      %s18 = sphi 0, %s22
      %p19 = scmp.ge.s32.totalorder %s18, 4
      %s28 = sphi 0, %s30
      %s31 = sphi 0, %s28
      %s32 = sphi 0, %s31
      %s48 = sphi 0, %s32
      %s54 = sphi 0, %s56
      %s57 = sphi 0, %s54
      %s58 = sphi 0, %s57
      %s74 = sphi 0, %s58
      %s80 = sphi 0, %s82
      %s83 = sphi 0, %s80
      %s84 = sphi 0, %s83
      %s100 = sphi 0, %s84
      %s106 = sphi 0, %s108
      %s109 = sphi 0, %s106
      %s110 = sphi 0, %s109
      %s126 = sphi 0, %s110
    $region4: #{tpu_custom_call.1} parent=1 // loop_header_branch
      %21 = sbr.rel (%p19) target = $region8
    $region5: #{tpu_custom_call.1} parent=1 // loop_body
      %s23 = ssub.s32 %s18, 1
      %s24 = ssub.s32 %s18, 2
      %s25 = sadd.s32 %s18, 1
      %s26 = ssub.s32 %s18, %s25
      %p27 = scmp.eq.s32.totalorder %s26, 0
      %s29 = sadd.s32 %s28, 1
      %s30 = scalar_select %p27, %s28, %s29
      %p33 = pneg %p27
      %p34 = scmp.eq.s32.totalorder %s18, 1
      %p35 = por %p33, %p34
      %p36 = scmp.ne.s32.totalorder %s28, %s31
      %p37 = scmp.eq.s32.totalorder %s18, 0
      %p38 = por %p36, %p37
      %p39 = scmp.ne.s32.totalorder %s28, %s31
      %p40 = scmp.eq.s32.totalorder %s23, 1
      %p41 = por %p39, %p40
      %p42 = scmp.ne.s32.totalorder %s31, %s32
      %p43 = scmp.eq.s32.totalorder %s23, 0
      %p44 = por %p42, %p43
      %p45 = scmp.ne.s32.totalorder %s31, %s32
      %p46 = scmp.eq.s32.totalorder %s24, 1
      %p47 = por %p45, %p46
      %p49 = scmp.ne.s32.totalorder %s32, %s48
      %p50 = scmp.eq.s32.totalorder %s24, 0
      %p51 = por %p49, %p50
      %s52 = ssub.s32 %s18, %s25
      %p53 = scmp.eq.s32.totalorder %s52, 0
      %s55 = sadd.s32 %s54, 1
      %s56 = scalar_select %p53, %s54, %s55
      %p59 = pneg %p53
      %p60 = scmp.eq.s32.totalorder %s18, 1
      %p61 = por %p59, %p60
      %p62 = scmp.ne.s32.totalorder %s54, %s57
      %p63 = scmp.eq.s32.totalorder %s18, 0
      %p64 = por %p62, %p63
      %p65 = scmp.ne.s32.totalorder %s54, %s57
      %p66 = scmp.eq.s32.totalorder %s23, 1
      %p67 = por %p65, %p66
      %p68 = scmp.ne.s32.totalorder %s57, %s58
      %p69 = scmp.eq.s32.totalorder %s23, 0
      %p70 = por %p68, %p69
      %p71 = scmp.ne.s32.totalorder %s57, %s58
      %p72 = scmp.eq.s32.totalorder %s24, 1
      %p73 = por %p71, %p72
      %p75 = scmp.ne.s32.totalorder %s58, %s74
      %p76 = scmp.eq.s32.totalorder %s24, 0
      %p77 = por %p75, %p76
      %s78 = ssub.s32 %s18, %s25
      %p79 = scmp.eq.s32.totalorder %s78, 0
      %s81 = sadd.s32 %s80, 1
      %s82 = scalar_select %p79, %s80, %s81
      %p85 = pneg %p79
      %p86 = scmp.eq.s32.totalorder %s18, 1
      %p87 = por %p85, %p86
      %p88 = scmp.ne.s32.totalorder %s80, %s83
      %p89 = scmp.eq.s32.totalorder %s18, 0
      %p90 = por %p88, %p89
      %p91 = scmp.ne.s32.totalorder %s80, %s83
      %p92 = scmp.eq.s32.totalorder %s23, 1
      %p93 = por %p91, %p92
      %p94 = scmp.ne.s32.totalorder %s83, %s84
      %p95 = scmp.eq.s32.totalorder %s23, 0
      %p96 = por %p94, %p95
      %p97 = scmp.ne.s32.totalorder %s83, %s84
      %p98 = scmp.eq.s32.totalorder %s24, 1
      %p99 = por %p97, %p98
      %p101 = scmp.ne.s32.totalorder %s84, %s100
      %p102 = scmp.eq.s32.totalorder %s24, 0
      %p103 = por %p101, %p102
      %s104 = ssub.s32 %s18, %s25
      %p105 = scmp.eq.s32.totalorder %s104, 0
      %s107 = sadd.s32 %s106, 1
      %s108 = scalar_select %p105, %s106, %s107
      %p111 = pneg %p105
      %p112 = scmp.eq.s32.totalorder %s18, 1
      %p113 = por %p111, %p112
      %p114 = scmp.ne.s32.totalorder %s106, %s109
      %p115 = scmp.eq.s32.totalorder %s18, 0
      %p116 = por %p114, %p115
      %p117 = scmp.ne.s32.totalorder %s106, %s109
      %p118 = scmp.eq.s32.totalorder %s23, 1
      %p119 = por %p117, %p118
      %p120 = scmp.ne.s32.totalorder %s109, %s110
      %p121 = scmp.eq.s32.totalorder %s23, 0
      %p122 = por %p120, %p121
      %p123 = scmp.ne.s32.totalorder %s109, %s110
      %p124 = scmp.eq.s32.totalorder %s24, 1
      %p125 = por %p123, %p124
      %p127 = scmp.ne.s32.totalorder %s110, %s126
      %p128 = scmp.eq.s32.totalorder %s24, 0
      %p129 = por %p127, %p128
      %p130 = scmp.le.s32.totalorder 1, %s18
      %p131 = scmp.lt.s32.totalorder %s18, 3
      %p132 = pnand %p130, %p131
      %p133 = pneg %p132
      // Predicated region
      $region9: #{tpu_custom_call.1} parent=5 // pred_check
        _
      $region10: #{tpu_custom_call.1} parent=5 // pred_check_branch
        %135 = sbr.rel (%p132) target = $region12
      $region11: #{tpu_custom_call.1} parent=5 // pred_region
        %s136 = ssub.s32 %s18, 1
      $region12: #{tpu_custom_call.1} parent=5 // pred_fallthru
        _
      %p137 = scmp.lt.s32.totalorder %s18, 2
      // Predicated region
      $region13: #{tpu_custom_call.1} parent=5 // pred_check
        %p138 = pneg %p137
      $region14: #{tpu_custom_call.1} parent=5 // pred_check_branch
        %140 = sbr.rel (%p138) target = $region16
      $region15: #{tpu_custom_call.1} parent=5 // pred_region
        // Predicated region
        $region17: #{tpu_custom_call.1} parent=15 // pred_check
          %p141 = pneg %p38
        $region18: #{tpu_custom_call.1} parent=15 // pred_check_branch
          %143 = sbr.rel (%p141) target = $region20
        $region19: #{tpu_custom_call.1} parent=15 // pred_region
          %s144 = sand.u32 %s28, 1
          %s145 = scalar_lea.sflag [#allocation3], %s144
          %s146 = sand.u32 %s28, 1
          %s147 = smul.addr %s146, 24
          %s148 = scalar_lea.vmem [#allocation2], %s147
          %s149 = smul.u32 3, %s18
          %s151 = ssub.s32 384, 384
          %152 = vsyncadd %s145, %s151
          %s153 = smul.addr %s149, 128
          %s154 = scalar_lea.hbm %s0, %s153
          %s155 = sshll.u32 %s148, 4
          %s156 = int_to_ptr.vmem [resolvable:$true] %s155
          %161 = dma.hbm_to_vmem [thread:$0]  %s154, 384, %s156, %s145, 128, 128, 8
        $region20: #{tpu_custom_call.1} parent=15 // pred_fallthru
          _
        // Predicated region
        $region21: #{tpu_custom_call.1} parent=15 // pred_check
          %p162 = pneg %p64
        $region22: #{tpu_custom_call.1} parent=15 // pred_check_branch
          %164 = sbr.rel (%p162) target = $region24
        $region23: #{tpu_custom_call.1} parent=15 // pred_region
          %s165 = sand.u32 %s18, 1
          %s166 = scalar_lea.sflag [#allocation6], %s165
          %s167 = sand.u32 %s54, 1
          %s168 = smul.addr %s167, 24
          %s169 = scalar_lea.vmem [#allocation5], %s168
          %s170 = smul.u32 3, %s18
          %s172 = ssub.s32 384, 384
          %173 = vsyncadd %s166, %s172
          %s174 = smul.addr %s170, 128
          %s175 = scalar_lea.hbm %s1, %s174
          %s176 = sshll.u32 %s169, 4
          %s177 = int_to_ptr.vmem [resolvable:$true] %s176
          %182 = dma.hbm_to_vmem [thread:$0]  %s175, 384, %s177, %s166, 128, 128, 8
        $region24: #{tpu_custom_call.1} parent=15 // pred_fallthru
          _
        // Predicated region
        $region25: #{tpu_custom_call.1} parent=15 // pred_check
          %p183 = pneg %p90
        $region26: #{tpu_custom_call.1} parent=15 // pred_check_branch
          %185 = sbr.rel (%p183) target = $region28
        $region27: #{tpu_custom_call.1} parent=15 // pred_region
          %s186 = sand.u32 %s18, 1
          %s187 = scalar_lea.sflag [#allocation6], %s186
          %s188 = sand.u32 %s80, 1
          %s189 = smul.addr %s188, 24
          %s190 = scalar_lea.vmem [#allocation7], %s189
          %s191 = smul.u32 3, %s18
          %s193 = ssub.s32 384, 384
          %194 = vsyncadd %s187, %s193
          %s195 = smul.addr %s191, 128
          %s196 = scalar_lea.hbm %s2, %s195
          %s197 = sshll.u32 %s190, 4
          %s198 = int_to_ptr.vmem [resolvable:$true] %s197
          %203 = dma.hbm_to_vmem [thread:$0]  %s196, 384, %s198, %s187, 128, 128, 8
        $region28: #{tpu_custom_call.1} parent=15 // pred_fallthru
          _
      $region16: #{tpu_custom_call.1} parent=5 // pred_fallthru
        _
      %p204 = scmp.le.s32.totalorder 1, %s18
      %p205 = scmp.lt.s32.totalorder %s18, 3
      %p206 = pnand %p204, %p205
      %p207 = pneg %p206
      // Predicated region
      $region29: #{tpu_custom_call.1} parent=5 // pred_check
        _
      $region30: #{tpu_custom_call.1} parent=5 // pred_check_branch
        %209 = sbr.rel (%p206) target = $region32
      $region31: #{tpu_custom_call.1} parent=5 // pred_region
        %s210 = ssub.s32 %s18, 1
        %s211 = sand.u32 %s31, 1
        %s212 = scalar_lea.sflag [#allocation3], %s211
        %s213 = sand.u32 %s31, 1
        %s214 = smul.addr %s213, 24
        %s215 = scalar_lea.vmem [#allocation2], %s214
        // Predicated region
        $region33: #{tpu_custom_call.1} parent=31 // pred_check
          %p216 = pneg %p44
        $region34: #{tpu_custom_call.1} parent=31 // pred_check_branch
          %218 = sbr.rel (%p216) target = $region36
        $region35: #{tpu_custom_call.1} parent=31 // pred_region
          %219 = dma.done %s212, 384
        $region36: #{tpu_custom_call.1} parent=31 // pred_fallthru
          _
        %s220 = sand.u32 %s23, 1
        %s221 = scalar_lea.sflag [#allocation6], %s220
        %s222 = sand.u32 %s57, 1
        %s223 = smul.addr %s222, 24
        %s224 = scalar_lea.vmem [#allocation5], %s223
        // Predicated region
        $region37: #{tpu_custom_call.1} parent=31 // pred_check
          %p225 = pneg %p70
        $region38: #{tpu_custom_call.1} parent=31 // pred_check_branch
          %227 = sbr.rel (%p225) target = $region40
        $region39: #{tpu_custom_call.1} parent=31 // pred_region
          %228 = dma.done %s221, 384
        $region40: #{tpu_custom_call.1} parent=31 // pred_fallthru
          _
        %s229 = sand.u32 %s23, 1
        %s230 = scalar_lea.sflag [#allocation6], %s229
        %s231 = sand.u32 %s83, 1
        %s232 = smul.addr %s231, 24
        %s233 = scalar_lea.vmem [#allocation7], %s232
        // Predicated region
        $region41: #{tpu_custom_call.1} parent=31 // pred_check
          %p234 = pneg %p96
        $region42: #{tpu_custom_call.1} parent=31 // pred_check_branch
          %236 = sbr.rel (%p234) target = $region44
        $region43: #{tpu_custom_call.1} parent=31 // pred_region
          %237 = dma.done %s230, 384
        $region44: #{tpu_custom_call.1} parent=31 // pred_fallthru
          _
        %s238 = sand.u32 %s31, 1
        %s239 = scalar_lea.sflag [#allocation3], %s238
        %s240 = sand.u32 %s31, 1
        %s241 = smul.addr %s240, 24
        %s242 = scalar_lea.vmem [#allocation2], %s241
        %p243 = pneg %p44
        %p244 = pneg %p41
        %s245 = sand.u32 %s23, 1
        %s246 = scalar_lea.sflag [#allocation6], %s245
        %s247 = sand.u32 %s57, 1
        %s248 = smul.addr %s247, 24
        %s249 = scalar_lea.vmem [#allocation5], %s248
        %p250 = pneg %p70
        %p251 = pneg %p67
        %s252 = sand.u32 %s23, 1
        %s253 = scalar_lea.sflag [#allocation6], %s252
        %s254 = sand.u32 %s83, 1
        %s255 = smul.addr %s254, 24
        %s256 = scalar_lea.vmem [#allocation7], %s255
        %p257 = pneg %p96
        %p258 = pneg %p93
        %p259 = pneg %p122
        %p260 = pneg %p119
        %s261 = sand.u32 %s109, 1
        %s262 = scalar_lea.sflag [#allocation4], %s261
        %s263 = sand.u32 %s109, 1
        %s264 = smul.addr %s263, 8
        %s265 = scalar_lea.vmem [#allocation8], %s264
        %s266 = smul.u32 3, %s23
        %s267 = smul.u32 3, %s23
        %s268 = smul.u32 3, %s23
        %v269 = vld [vmem:[%s215] sm:$0xff]
        %v270 = vld [vmem:[%s215 + $0x8] sm:$0xff]
        %v271 = vld [vmem:[%s215 + $0x10] sm:$0xff]
        %v272 = vld [vmem:[%s224] sm:$0xff]
        %v273 = vld [vmem:[%s224 + $0x8] sm:$0xff]
        %v274 = vld [vmem:[%s224 + $0x10] sm:$0xff]
        %v275 = vld [vmem:[%s233] sm:$0xff]
        %v276 = vld [vmem:[%s233 + $0x8] sm:$0xff]
        %v277 = vld [vmem:[%s233 + $0x10] sm:$0xff]
        %v278 = vsub.f32 %v269, %v272
        %v279 = vsub.f32 %v270, %v273
        %v280 = vsub.f32 %v271, %v274
        %v281 = vsub.f32 0.0, %v275
        %v282 = vsub.f32 0.0, %v276
        %v283 = vsub.f32 0.0, %v277
        %v284 = vmul.f32 %v281, 1.442695
        %v285 = vpow.pop %v284
        %v286 = vmul.f32 %v282, 1.442695
        %v287 = vpow.pop %v286
        %v288 = vmul.f32 %v283, 1.442695
        %v289 = vpow.pop %v288
        %v290 = vmul.f32 %v278, %v278
        %v291 = vmul.f32 %v279, %v279
        %v292 = vmul.f32 %v280, %v280
        %v293 = vmul.f32 %v285, %v290
        %v294 = vmul.f32 %v287, %v291
        %v295 = vmul.f32 %v289, %v292
        %v296 = vadd.f32 %v293, %v275
        %v297 = vadd.f32 %v294, %v276
        %v298 = vadd.f32 %v295, %v277
        %v299 = vadd.f32 %v296, %v297
        %v300 = vadd.f32 %v299, %v298
        %301 = vst [vmem:[%s265] sm:$0xff] %v300
        %s302 = sand.u32 %s109, 1
        %s303 = scalar_lea.sflag [#allocation4], %s302
        %s304 = sand.u32 %s109, 1
        %s305 = smul.addr %s304, 8
        %s306 = scalar_lea.vmem [#allocation8], %s305
        // Predicated region
        $region45: #{tpu_custom_call.1} parent=31 // pred_check
          %p307 = pneg %p119
        $region46: #{tpu_custom_call.1} parent=31 // pred_check_branch
          %309 = sbr.rel (%p307) target = $region48
        $region47: #{tpu_custom_call.1} parent=31 // pred_region
          %s311 = ssub.s32 128, 128
          %312 = vsyncadd %s303, %s311
          %s313 = smul.addr %s23, 128
          %s314 = scalar_lea.hbm %s3, %s313
          %s316 = sshll.u32 %s306, 4
          %s317 = int_to_ptr.vmem [resolvable:$true] %s316
          %319 = dma.vmem_to_hbm [thread:$0]  %s317, 128, %s314, %s303
        $region48: #{tpu_custom_call.1} parent=31 // pred_fallthru
          _
      $region32: #{tpu_custom_call.1} parent=5 // pred_fallthru
        _
      %p320 = scmp.le.s32.totalorder 2, %s18
      // Predicated region
      $region49: #{tpu_custom_call.1} parent=5 // pred_check
        %p321 = pneg %p320
      $region50: #{tpu_custom_call.1} parent=5 // pred_check_branch
        %323 = sbr.rel (%p321) target = $region52
      $region51: #{tpu_custom_call.1} parent=5 // pred_region
        %s324 = ssub.s32 %s18, 2
        // Predicated region
        $region53: #{tpu_custom_call.1} parent=51 // pred_check
          %p325 = pneg %p125
        $region54: #{tpu_custom_call.1} parent=51 // pred_check_branch
          %327 = sbr.rel (%p325) target = $region56
        $region55: #{tpu_custom_call.1} parent=51 // pred_region
          %s328 = sand.u32 %s110, 1
          %s329 = scalar_lea.sflag [#allocation4], %s328
          %s330 = sand.u32 %s110, 1
          %s331 = smul.addr %s330, 8
          %s332 = scalar_lea.vmem [#allocation8], %s331
          %333 = dma.done %s329, 128
        $region56: #{tpu_custom_call.1} parent=51 // pred_fallthru
          _
      $region52: #{tpu_custom_call.1} parent=5 // pred_fallthru
        _
    $region6: #{tpu_custom_call.1} parent=1 // loop_footer
      %s22 = sadd.s32 1, %s18
    $region7: #{tpu_custom_call.1} parent=1 // loop_footer_branch
      %17 = sbr.rel target = $region3
    $region8: #{tpu_custom_call.1} parent=1 // loop_exit
      _
    %334 = vsyncpa [#allocation3], 1
    %s335 = scalar_lea.sflag [#allocation3], 1
    %336 = vsyncpa %s335, 1
    %337 = vsyncpa [#allocation6], 1
    %s338 = scalar_lea.sflag [#allocation6], 1
    %339 = vsyncpa %s338, 1
    %340 = vsyncpa [#allocation4], 1
    %s341 = scalar_lea.sflag [#allocation4], 1
    %342 = vsyncpa %s341, 1

</llo_original>
